<compile_context>
chip_gen: v5e
topology: v5e:2x2
jax: 0.10.0
libtpu: 0.0.40
codegen_flags: <defaults>
</compile_context>

<pallas_src>
import functools

import jax
import jax.numpy as jnp
from jax import lax
from jax.experimental import pallas as pl
from jax.experimental.pallas import tpu as pltpu


def _soft_ce_kernel(x_ref, t_ref, sum_ref, cnt_ref, *,
                    ignore_index, total_l, needs_tail_mask):
    # x_ref, t_ref:   (1, C, TL)   -- one batch element, all channels, TL lanes
    # sum_ref, cnt_ref: (1, 1, TL) -- per-lane partial sum / masked count,
    #                                 resident across the L grid axis.
    l = pl.program_id(1)

    @pl.when(l == 0)
    def _():
        sum_ref[...] = jnp.zeros_like(sum_ref)
        cnt_ref[...] = jnp.zeros_like(cnt_ref)

    x = x_ref[...].astype(jnp.float32)          # (1, C, TL)
    t = t_ref[...].astype(jnp.float32)          # (1, C, TL)

    # log_softmax over the channel axis (axis=1, the sublane axis of the
    # block).  With C on sublanes and TL on lanes these reductions operate on
    # fully lane-packed vregs.
    m = jnp.max(x, axis=1, keepdims=True)                         # (1, 1, TL)
    z = x - m
    lse = jnp.log(jnp.sum(jnp.exp(z), axis=1, keepdims=True))     # (1, 1, TL)
    log_likelihood = z - lse                                      # (1, C, TL)

    mask = t != jnp.float32(ignore_index)                         # (1, C, TL)
    if needs_tail_mask:
        # Mask out lanes past the end of the spatial axis for the last tile.
        tl = x.shape[-1]
        lane = lax.broadcasted_iota(jnp.int32, (1, 1, tl), 2)
        valid = (l * tl + lane) < total_l                         # (1, 1, TL)
        mask = mask & valid

    val = jnp.where(mask, -log_likelihood * t, jnp.float32(0.0))  # (1, C, TL)

    # Lane-wise partials: only the cheap C-axis (sublane) reduce happens per
    # step; the cross-lane reduce is done once in the wrapper epilogue.
    sum_ref[...] += jnp.sum(val, axis=1, keepdims=True)
    cnt_ref[...] += jnp.sum(mask.astype(jnp.float32), axis=1, keepdims=True)


def soft_cross_entropy(inputs, target, ignore_index=-1,
                       target_block_bytes=4 * 1024 * 1024):
    """inputs, target: (N, C, H, W).  Returns scalar float32 loss."""
    assert inputs.shape == target.shape
    N, C, H, W = inputs.shape
    L = H * W

    # Free relayout: NCHW -> (N, C, L).  No transpose, no extra HBM traffic.
    x3 = inputs.reshape(N, C, L)
    t3 = target.reshape(N, C, L)

    # Pick TL so one input block is ~target_block_bytes (multiple of 128 lanes).
    itemsize = max(jnp.dtype(inputs.dtype).itemsize,
                   jnp.dtype(target.dtype).itemsize)
    tl = target_block_bytes // (C * itemsize)
    tl = max(128, (tl // 128) * 128)
    if tl >= L:
        tl = L          # full spatial extent: always a legal block dim
        num_l = 1
    else:
        num_l = (L + tl - 1) // tl
    needs_tail_mask = (L % tl) != 0

    kernel = functools.partial(
        _soft_ce_kernel,
        ignore_index=float(ignore_index),
        total_l=L,
        needs_tail_mask=needs_tail_mask,
    )

    sum_out, cnt_out = pl.pallas_call(
        kernel,
        out_shape=(
            jax.ShapeDtypeStruct((N, 1, tl), jnp.float32),
            jax.ShapeDtypeStruct((N, 1, tl), jnp.float32),
        ),
        grid_spec=pltpu.PrefetchScalarGridSpec(
            num_scalar_prefetch=0,
            grid=(N, num_l),
            in_specs=[
                pl.BlockSpec((1, C, tl), lambda n, l: (n, 0, l)),
                pl.BlockSpec((1, C, tl), lambda n, l: (n, 0, l)),
            ],
            out_specs=[
                pl.BlockSpec((1, 1, tl), lambda n, l: (n, 0, 0)),
                pl.BlockSpec((1, 1, tl), lambda n, l: (n, 0, 0)),
            ],
        ),
        compiler_params=pltpu.CompilerParams(
            # N is independent -> sharded across TensorCores on v7x megacore.
            # L is the accumulation (revisit) axis -> "arbitrary".
            dimension_semantics=("parallel", "arbitrary"),
            # ~16 MiB of double-buffered input blocks + small accumulators;
            # fits every generation (incl. v7x 64 MiB physical VMEM).
            vmem_limit_bytes=48 * 1024 * 1024,
        ),
    )(x3, t3)

    # Tiny epilogue in XLA: one cross-lane reduce of each partial + divide.
    # NOTE: if every element is masked (count == 0) this yields NaN, matching
    # the PyTorch reference behaviour.
    return jnp.sum(sum_out) / jnp.sum(cnt_out)


def _reference(inputs, target, ignore_index=-1):
    mask = target != ignore_index
    ll = jax.nn.log_softmax(inputs, axis=1)
    vals = jnp.where(mask, -ll * target, 0.0)
    return jnp.sum(vals) / jnp.sum(mask.astype(jnp.float32))


if __name__ == "__main__":
    key = jax.random.PRNGKey(0)
    k1, k2, k3 = jax.random.split(key, 3)

    N, C, H, W = 2, 4, 16, 16
    inputs = jax.random.normal(k1, (N, C, H, W), dtype=jnp.float32)
    # Target "distribution"; sprinkle some ignore_index (-1) entries so the
    # mask path is exercised.
    target = jax.nn.softmax(jax.random.normal(k2, (N, C, H, W)), axis=1)
    drop = jax.random.bernoulli(k3, p=0.1, shape=(N, C, H, W))
    target = jnp.where(drop, jnp.float32(-1.0), target)

    loss = soft_cross_entropy(inputs, target, ignore_index=-1)
    loss = jax.block_until_ready(loss)

    ref = _reference(inputs, target, ignore_index=-1)
    assert jnp.allclose(loss, ref, rtol=1e-5, atol=1e-5), (loss, ref)

    print("KERNEL_OK")
</pallas_src>

<mosaic_0001>
module attributes {stable_mosaic.version = 11 : i64} {
  func.func @_soft_ce_kernel(%arg0: i32, %arg1: i32, %arg2: memref<1x4x256xf32, #tpu.memory_space<vmem>>, %arg3: memref<1x4x256xf32, #tpu.memory_space<vmem>>, %arg4: memref<1x1x256xf32, #tpu.memory_space<vmem>>, %arg5: memref<1x1x256xf32, #tpu.memory_space<vmem>>) attributes {dimension_semantics = [#tpu.dimension_semantics<parallel>, #tpu.dimension_semantics<arbitrary>], iteration_bounds = array<i64: 2, 1>, scalar_prefetch = 0 : i64, scratch_operands = 0 : i64, tpu.core_type = #tpu.core_type<tc>, window_params = [{transform_indices = @transform_0, window_bounds = array<i64: 1, 4, 256>}, {transform_indices = @transform_1, window_bounds = array<i64: 1, 4, 256>}, {transform_indices = @transform_2, window_bounds = array<i64: 1, 1, 256>}, {transform_indices = @transform_3, window_bounds = array<i64: 1, 1, 256>}]} {
    %c0_i32 = arith.constant 0 : i32
    %0 = arith.cmpi eq, %arg1, %c0_i32 : i32
    %1 = arith.extui %0 : i1 to i32
    %c0_i32_0 = arith.constant 0 : i32
    %2 = arith.cmpi ne, %1, %c0_i32_0 : i32
    scf.if %2 {
      %cst_24 = arith.constant 0.000000e+00 : f32
      %34 = vector.broadcast %cst_24 : f32 to vector<1x1x256xf32>
      %c0_25 = arith.constant 0 : index
      %c0_26 = arith.constant 0 : index
      %c0_27 = arith.constant 0 : index
      %35 = vector.load %arg4[%c0_25, %c0_26, %c0_27] : memref<1x1x256xf32, #tpu.memory_space<vmem>>, vector<1x1x256xf32>
      tpu.vector_store %arg4[%c0_25, %c0_26, %c0_27], %34 {strides = array<i32>} : memref<1x1x256xf32, #tpu.memory_space<vmem>>, vector<1x1x256xf32>,
      %cst_28 = arith.constant 0.000000e+00 : f32
      %36 = vector.broadcast %cst_28 : f32 to vector<1x1x256xf32>
      %c0_29 = arith.constant 0 : index
      %c0_30 = arith.constant 0 : index
      %c0_31 = arith.constant 0 : index
      %37 = vector.load %arg5[%c0_29, %c0_30, %c0_31] : memref<1x1x256xf32, #tpu.memory_space<vmem>>, vector<1x1x256xf32>
      tpu.vector_store %arg5[%c0_29, %c0_30, %c0_31], %36 {strides = array<i32>} : memref<1x1x256xf32, #tpu.memory_space<vmem>>, vector<1x1x256xf32>,
    } else {
    }
    %c0 = arith.constant 0 : index
    %c0_1 = arith.constant 0 : index
    %c0_2 = arith.constant 0 : index
    %3 = vector.load %arg2[%c0, %c0_1, %c0_2] : memref<1x4x256xf32, #tpu.memory_space<vmem>>, vector<1x4x256xf32>
    %c0_3 = arith.constant 0 : index
    %c0_4 = arith.constant 0 : index
    %c0_5 = arith.constant 0 : index
    %4 = vector.load %arg3[%c0_3, %c0_4, %c0_5] : memref<1x4x256xf32, #tpu.memory_space<vmem>>, vector<1x4x256xf32>
    %cst = arith.constant dense<0xFF800000> : vector<1x256xf32>
    %5 = vector.multi_reduction <maximumf>, %3, %cst [1] : vector<1x4x256xf32> to vector<1x256xf32>
    %6 = vector.shape_cast %5 : vector<1x256xf32> to vector<1x1x256xf32>
    %7 = vector.broadcast %6 : vector<1x1x256xf32> to vector<1x4x256xf32>
    %8 = arith.subf %3, %7 : vector<1x4x256xf32>
    %9 = math.exp %8 : vector<1x4x256xf32>
    %cst_6 = arith.constant dense<0.000000e+00> : vector<1x256xf32>
    %10 = vector.multi_reduction <add>, %9, %cst_6 [1] : vector<1x4x256xf32> to vector<1x256xf32>
    %11 = vector.shape_cast %10 : vector<1x256xf32> to vector<1x1x256xf32>
    %12 = math.log %11 : vector<1x1x256xf32>
    %13 = vector.broadcast %12 : vector<1x1x256xf32> to vector<1x4x256xf32>
    %14 = arith.subf %8, %13 : vector<1x4x256xf32>
    %cst_7 = arith.constant -1.000000e+00 : f32
    %15 = vector.broadcast %cst_7 : f32 to vector<1x4x256xf32>
    %16 = arith.cmpf one, %4, %15 : vector<1x4x256xf32>
    %cst_8 = arith.constant 0.000000e+00 : f32
    %17 = vector.broadcast %cst_8 : f32 to vector<1x4x256xf32>
    %18 = arith.subf %17, %14 : vector<1x4x256xf32>
    %19 = arith.mulf %18, %4 : vector<1x4x256xf32>
    %cst_9 = arith.constant 0.000000e+00 : f32
    %20 = vector.broadcast %cst_9 : f32 to vector<1x4x256xf32>
    %21 = arith.select %16, %19, %20 : vector<1x4x256xi1>, vector<1x4x256xf32>
    %c0_10 = arith.constant 0 : index
    %c0_11 = arith.constant 0 : index
    %c0_12 = arith.constant 0 : index
    %22 = vector.load %arg4[%c0_10, %c0_11, %c0_12] : memref<1x1x256xf32, #tpu.memory_space<vmem>>, vector<1x1x256xf32>
    %cst_13 = arith.constant dense<0.000000e+00> : vector<1x256xf32>
    %23 = vector.multi_reduction <add>, %21, %cst_13 [1] : vector<1x4x256xf32> to vector<1x256xf32>
    %24 = vector.shape_cast %23 : vector<1x256xf32> to vector<1x1x256xf32>
    %25 = arith.addf %22, %24 : vector<1x1x256xf32>
    %c0_14 = arith.constant 0 : index
    %c0_15 = arith.constant 0 : index
    %c0_16 = arith.constant 0 : index
    %26 = vector.load %arg4[%c0_14, %c0_15, %c0_16] : memref<1x1x256xf32, #tpu.memory_space<vmem>>, vector<1x1x256xf32>
    tpu.vector_store %arg4[%c0_14, %c0_15, %c0_16], %25 {strides = array<i32>} : memref<1x1x256xf32, #tpu.memory_space<vmem>>, vector<1x1x256xf32>,
    %c0_17 = arith.constant 0 : index
    %c0_18 = arith.constant 0 : index
    %c0_19 = arith.constant 0 : index
    %27 = vector.load %arg5[%c0_17, %c0_18, %c0_19] : memref<1x1x256xf32, #tpu.memory_space<vmem>>, vector<1x1x256xf32>
    %28 = arith.extui %16 : vector<1x4x256xi1> to vector<1x4x256xi32>
    %29 = arith.sitofp %28 : vector<1x4x256xi32> to vector<1x4x256xf32>
    %cst_20 = arith.constant dense<0.000000e+00> : vector<1x256xf32>
    %30 = vector.multi_reduction <add>, %29, %cst_20 [1] : vector<1x4x256xf32> to vector<1x256xf32>
    %31 = vector.shape_cast %30 : vector<1x256xf32> to vector<1x1x256xf32>
    %32 = arith.addf %27, %31 : vector<1x1x256xf32>
    %c0_21 = arith.constant 0 : index
    %c0_22 = arith.constant 0 : index
    %c0_23 = arith.constant 0 : index
    %33 = vector.load %arg5[%c0_21, %c0_22, %c0_23] : memref<1x1x256xf32, #tpu.memory_space<vmem>>, vector<1x1x256xf32>
    tpu.vector_store %arg5[%c0_21, %c0_22, %c0_23], %32 {strides = array<i32>} : memref<1x1x256xf32, #tpu.memory_space<vmem>>, vector<1x1x256xf32>,
    return
  }
  func.func @transform_0(%arg0: i32, %arg1: i32) -> (i32, i32, i32) {
    %c0_i32 = arith.constant 0 : i32
    %c0_i32_0 = arith.constant 0 : i32
    return %arg0, %c0_i32, %arg1 : i32, i32, i32
  }
  func.func @transform_1(%arg0: i32, %arg1: i32) -> (i32, i32, i32) {
    %c0_i32 = arith.constant 0 : i32
    %c0_i32_0 = arith.constant 0 : i32
    return %arg0, %c0_i32, %arg1 : i32, i32, i32
  }
  func.func @transform_2(%arg0: i32, %arg1: i32) -> (i32, i32, i32) {
    %c0_i32 = arith.constant 0 : i32
    %c0_i32_0 = arith.constant 0 : i32
    %c0_i32_1 = arith.constant 0 : i32
    return %arg0, %c0_i32, %c0_i32_0 : i32, i32, i32
  }
  func.func @transform_3(%arg0: i32, %arg1: i32) -> (i32, i32, i32) {
    %c0_i32 = arith.constant 0 : i32
    %c0_i32_0 = arith.constant 0 : i32
    %c0_i32_1 = arith.constant 0 : i32
    return %arg0, %c0_i32, %c0_i32_0 : i32, i32, i32
  }
}

</mosaic_0001>

<llo_original>
// kernel: tpu_custom_call.1
$region0: #{tpu_custom_call.1}
  #allocation0 [shape = 'u32[]', space=smem, size = 0x4, offset = 0x4, fixed_abs, tag = 'smem constant byte address 0x4 - core index']
  #allocation1 [shape = 'u32[72,128]{1,0:T(1,128)}', space=vmem, size = 0x9000, scoped, tag = 'internal scratch']
  %s0 = inlined_call_operand.hbm [shape: f32[2,4,256], index: 0, kind: input, shape index: {}]
  %s1 = inlined_call_operand.hbm [shape: f32[2,4,256], index: 1, kind: input, shape index: {}]
  %s2 = inlined_call_operand.hbm [shape: f32[2,1,256], index: 2, kind: output, shape index: {0}]
  %s3 = inlined_call_operand.hbm [shape: f32[2,1,256], index: 3, kind: output, shape index: {1}]
  %4 = xla_tuple %s2, %s3
  %s5 = sld [smem:[#allocation0]]
  $region61: #{tpu_custom_call.1} parent=0
    _
  %s7 = ssub.s32 1, %s5
  %s8 = scalar_select 0, %s7, %s5
  $region1: #{tpu_custom_call.1} parent=0
    #allocation2 [shape = 'u8[8192]{0}', space=vmem, size = 0x2000, scoped, tag = 'input window, operand 0']
    #allocation3 [shape = 's32[2]{0}', space=sflag, size = 0x8, scoped, tag = 'scoped memory for tpu_custom_call.1']
    #allocation4 [shape = 's32[2]{0}', space=sflag, size = 0x8, scoped, tag = 'scoped memory for tpu_custom_call.1']
    #allocation5 [shape = 'u8[8192]{0}', space=vmem, size = 0x2000, scoped, tag = 'input window, operand 1']
    #allocation6 [shape = 's32[2]{0}', space=sflag, size = 0x8, scoped, tag = 'scoped memory for tpu_custom_call.1']
    #allocation7 [shape = 'u8[2048]{0}', space=vmem, size = 0x800, scoped, tag = 'output window, operand 0']
    #allocation8 [shape = 'u8[2048]{0}', space=vmem, size = 0x800, scoped, tag = 'output window, operand 1']
    #allocation9 [shape = 's32[2]{0}', space=sflag, size = 0x8, scoped, tag = 'scoped memory for tpu_custom_call.1']
    %9 = vsyncpa [#allocation3], 0
    %s10 = scalar_lea.sflag [#allocation3], 1
    %11 = vsyncpa %s10, 0
    %12 = vsyncpa [#allocation6], 0
    %s13 = scalar_lea.sflag [#allocation6], 1
    %14 = vsyncpa %s13, 0
    %15 = vsyncpa [#allocation4], 0
    %s16 = scalar_lea.sflag [#allocation4], 1
    %17 = vsyncpa %s16, 0
    %18 = vsyncpa [#allocation9], 0
    %s19 = scalar_lea.sflag [#allocation9], 1
    %20 = vsyncpa %s19, 0
    loop: start=0, step=1, limit=4
    $region2: #{tpu_custom_call.1} parent=1 // loop_pre_header
      _
    $region3: #{tpu_custom_call.1} parent=1 // loop_header
      %s22 = sphi 0, %s26
      %p23 = scmp.ge.s32.totalorder %s22, 4
      %s29 = sphi 0, %s41
      %s30 = sphi 0, %s37
      %s31 = sphi 0, %s29
      %s32 = sphi 0, %s30
      %s33 = sphi 0, %s31
      %s34 = sphi 0, %s32
      %s46 = sphi 0, %s48
      %s49 = sphi 0, %s46
      %s50 = sphi 0, %s49
      %s66 = sphi 0, %s50
      %s74 = sphi 0, %s76
      %s77 = sphi 0, %s74
      %s78 = sphi 0, %s77
      %s94 = sphi 0, %s78
      %s100 = sphi 0, %s102
      %s103 = sphi 0, %s100
      %s104 = sphi 0, %s103
      %s120 = sphi 0, %s104
      %s126 = sphi 0, %s128
      %s129 = sphi 0, %s126
      %s130 = sphi 0, %s129
      %s146 = sphi 0, %s130
    $region4: #{tpu_custom_call.1} parent=1 // loop_header_branch
      %25 = sbr.rel (%p23) target = $region8
    $region5: #{tpu_custom_call.1} parent=1 // loop_body
      %s27 = ssub.s32 %s22, 1
      %s28 = ssub.s32 %s22, 2
      %s35 = sadd.s32 1, %s30
      %p36 = scmp.ge.s32.totalorder %s35, 1
      %s37 = scalar_select %p36, 0, %s35
      %s38 = sadd.s32 1, %s29
      %s39 = scalar_select %p36, %s38, %s29
      %p40 = scmp.ge.s32.totalorder %s39, 2
      %s41 = scalar_select %p40, 0, %s39
      %s42 = ssub.s32 %s29, %s41
      %s43 = ssub.s32 %s30, %s37
      %s44 = sor.u32 %s42, %s43
      %p45 = scmp.eq.s32.totalorder %s44, 0
      %s47 = sadd.s32 %s46, 1
      %s48 = scalar_select %p45, %s46, %s47
      %p51 = pneg %p45
      %p52 = scmp.eq.s32.totalorder %s22, 1
      %p53 = por %p51, %p52
      %p54 = scmp.ne.s32.totalorder %s46, %s49
      %p55 = scmp.eq.s32.totalorder %s22, 0
      %p56 = por %p54, %p55
      %p57 = scmp.ne.s32.totalorder %s46, %s49
      %p58 = scmp.eq.s32.totalorder %s27, 1
      %p59 = por %p57, %p58
      %p60 = scmp.ne.s32.totalorder %s49, %s50
      %p61 = scmp.eq.s32.totalorder %s27, 0
      %p62 = por %p60, %p61
      %p63 = scmp.ne.s32.totalorder %s49, %s50
      %p64 = scmp.eq.s32.totalorder %s28, 1
      %p65 = por %p63, %p64
      %p67 = scmp.ne.s32.totalorder %s50, %s66
      %p68 = scmp.eq.s32.totalorder %s28, 0
      %p69 = por %p67, %p68
      %s70 = ssub.s32 %s29, %s41
      %s71 = ssub.s32 %s30, %s37
      %s72 = sor.u32 %s70, %s71
      %p73 = scmp.eq.s32.totalorder %s72, 0
      %s75 = sadd.s32 %s74, 1
      %s76 = scalar_select %p73, %s74, %s75
      %p79 = pneg %p73
      %p80 = scmp.eq.s32.totalorder %s22, 1
      %p81 = por %p79, %p80
      %p82 = scmp.ne.s32.totalorder %s74, %s77
      %p83 = scmp.eq.s32.totalorder %s22, 0
      %p84 = por %p82, %p83
      %p85 = scmp.ne.s32.totalorder %s74, %s77
      %p86 = scmp.eq.s32.totalorder %s27, 1
      %p87 = por %p85, %p86
      %p88 = scmp.ne.s32.totalorder %s77, %s78
      %p89 = scmp.eq.s32.totalorder %s27, 0
      %p90 = por %p88, %p89
      %p91 = scmp.ne.s32.totalorder %s77, %s78
      %p92 = scmp.eq.s32.totalorder %s28, 1
      %p93 = por %p91, %p92
      %p95 = scmp.ne.s32.totalorder %s78, %s94
      %p96 = scmp.eq.s32.totalorder %s28, 0
      %p97 = por %p95, %p96
      %s98 = ssub.s32 %s29, %s41
      %p99 = scmp.eq.s32.totalorder %s98, 0
      %s101 = sadd.s32 %s100, 1
      %s102 = scalar_select %p99, %s100, %s101
      %p105 = pneg %p99
      %p106 = scmp.eq.s32.totalorder %s22, 1
      %p107 = por %p105, %p106
      %p108 = scmp.ne.s32.totalorder %s100, %s103
      %p109 = scmp.eq.s32.totalorder %s22, 0
      %p110 = por %p108, %p109
      %p111 = scmp.ne.s32.totalorder %s100, %s103
      %p112 = scmp.eq.s32.totalorder %s27, 1
      %p113 = por %p111, %p112
      %p114 = scmp.ne.s32.totalorder %s103, %s104
      %p115 = scmp.eq.s32.totalorder %s27, 0
      %p116 = por %p114, %p115
      %p117 = scmp.ne.s32.totalorder %s103, %s104
      %p118 = scmp.eq.s32.totalorder %s28, 1
      %p119 = por %p117, %p118
      %p121 = scmp.ne.s32.totalorder %s104, %s120
      %p122 = scmp.eq.s32.totalorder %s28, 0
      %p123 = por %p121, %p122
      %s124 = ssub.s32 %s29, %s41
      %p125 = scmp.eq.s32.totalorder %s124, 0
      %s127 = sadd.s32 %s126, 1
      %s128 = scalar_select %p125, %s126, %s127
      %p131 = pneg %p125
      %p132 = scmp.eq.s32.totalorder %s22, 1
      %p133 = por %p131, %p132
      %p134 = scmp.ne.s32.totalorder %s126, %s129
      %p135 = scmp.eq.s32.totalorder %s22, 0
      %p136 = por %p134, %p135
      %p137 = scmp.ne.s32.totalorder %s126, %s129
      %p138 = scmp.eq.s32.totalorder %s27, 1
      %p139 = por %p137, %p138
      %p140 = scmp.ne.s32.totalorder %s129, %s130
      %p141 = scmp.eq.s32.totalorder %s27, 0
      %p142 = por %p140, %p141
      %p143 = scmp.ne.s32.totalorder %s129, %s130
      %p144 = scmp.eq.s32.totalorder %s28, 1
      %p145 = por %p143, %p144
      %p147 = scmp.ne.s32.totalorder %s130, %s146
      %p148 = scmp.eq.s32.totalorder %s28, 0
      %p149 = por %p147, %p148
      %p150 = scmp.le.s32.totalorder 1, %s22
      %p151 = scmp.lt.s32.totalorder %s22, 3
      %p152 = pnand %p150, %p151
      %p153 = pneg %p152
      // Predicated region
      $region9: #{tpu_custom_call.1} parent=5 // pred_check
        _
      $region10: #{tpu_custom_call.1} parent=5 // pred_check_branch
        %155 = sbr.rel (%p152) target = $region12
      $region11: #{tpu_custom_call.1} parent=5 // pred_region
        %s156 = ssub.s32 %s22, 1
      $region12: #{tpu_custom_call.1} parent=5 // pred_fallthru
        _
      %p157 = scmp.lt.s32.totalorder %s22, 2
      // Predicated region
      $region13: #{tpu_custom_call.1} parent=5 // pred_check
        %p158 = pneg %p157
      $region14: #{tpu_custom_call.1} parent=5 // pred_check_branch
        %160 = sbr.rel (%p158) target = $region16
      $region15: #{tpu_custom_call.1} parent=5 // pred_region
        // Predicated region
        $region17: #{tpu_custom_call.1} parent=15 // pred_check
          %p161 = pneg %p56
        $region18: #{tpu_custom_call.1} parent=15 // pred_check_branch
          %163 = sbr.rel (%p161) target = $region20
        $region19: #{tpu_custom_call.1} parent=15 // pred_region
          %s164 = sand.u32 %s46, 1
          %s165 = scalar_lea.sflag [#allocation3], %s164
          %s166 = sand.u32 %s46, 1
          %s167 = smul.addr %s166, 8
          %s168 = scalar_lea.vmem [#allocation2], %s167
          %s169 = smul.u32 2, %s30
          %171 = vsyncadd %s165, 0
          %s172 = smul.addr %s29, 2
          %s173 = sadd.s32 %s169, %s172
          %s174 = smul.addr %s173, 4
          %s175 = scalar_lea.hbm %s0, %s174
          %s177 = sshll.u32 %s175, 4
          %s178 = int_to_ptr.hbm [resolvable:$true] %s177
          %s179 = sshll.u32 %s168, 4
          %s180 = int_to_ptr.vmem [resolvable:$true] %s179
          %182 = dma.hbm_to_vmem [thread:$0]  %s178, 128, %s180, %s165
        $region20: #{tpu_custom_call.1} parent=15 // pred_fallthru
          _
        // Predicated region
        $region21: #{tpu_custom_call.1} parent=15 // pred_check
          %p183 = pneg %p84
        $region22: #{tpu_custom_call.1} parent=15 // pred_check_branch
          %185 = sbr.rel (%p183) target = $region24
        $region23: #{tpu_custom_call.1} parent=15 // pred_region
          %s186 = sand.u32 %s74, 1
          %s187 = scalar_lea.sflag [#allocation6], %s186
          %s188 = sand.u32 %s74, 1
          %s189 = smul.addr %s188, 8
          %s190 = scalar_lea.vmem [#allocation5], %s189
          %s191 = smul.u32 2, %s30
          %193 = vsyncadd %s187, 0
          %s194 = smul.addr %s29, 2
          %s195 = sadd.s32 %s191, %s194
          %s196 = smul.addr %s195, 4
          %s197 = scalar_lea.hbm %s1, %s196
          %s199 = sshll.u32 %s197, 4
          %s200 = int_to_ptr.hbm [resolvable:$true] %s199
          %s201 = sshll.u32 %s190, 4
          %s202 = int_to_ptr.vmem [resolvable:$true] %s201
          %204 = dma.hbm_to_vmem [thread:$0]  %s200, 128, %s202, %s187
        $region24: #{tpu_custom_call.1} parent=15 // pred_fallthru
          _
      $region16: #{tpu_custom_call.1} parent=5 // pred_fallthru
        _
      %p205 = scmp.le.s32.totalorder 1, %s22
      %p206 = scmp.lt.s32.totalorder %s22, 3
      %p207 = pnand %p205, %p206
      %p208 = pneg %p207
      // Predicated region
      $region25: #{tpu_custom_call.1} parent=5 // pred_check
        _
      $region26: #{tpu_custom_call.1} parent=5 // pred_check_branch
        %210 = sbr.rel (%p207) target = $region28
      $region27: #{tpu_custom_call.1} parent=5 // pred_region
        %s211 = ssub.s32 %s22, 1
        %s212 = sand.u32 %s49, 1
        %s213 = scalar_lea.sflag [#allocation3], %s212
        %s214 = sand.u32 %s49, 1
        %s215 = smul.addr %s214, 8
        %s216 = scalar_lea.vmem [#allocation2], %s215
        // Predicated region
        $region29: #{tpu_custom_call.1} parent=27 // pred_check
          %p217 = pneg %p62
        $region30: #{tpu_custom_call.1} parent=27 // pred_check_branch
          %219 = sbr.rel (%p217) target = $region32
        $region31: #{tpu_custom_call.1} parent=27 // pred_region
          %221 = dma.done %s213, 128
        $region32: #{tpu_custom_call.1} parent=27 // pred_fallthru
          _
        %s222 = sand.u32 %s77, 1
        %s223 = scalar_lea.sflag [#allocation6], %s222
        %s224 = sand.u32 %s77, 1
        %s225 = smul.addr %s224, 8
        %s226 = scalar_lea.vmem [#allocation5], %s225
        // Predicated region
        $region33: #{tpu_custom_call.1} parent=27 // pred_check
          %p227 = pneg %p90
        $region34: #{tpu_custom_call.1} parent=27 // pred_check_branch
          %229 = sbr.rel (%p227) target = $region36
        $region35: #{tpu_custom_call.1} parent=27 // pred_region
          %231 = dma.done %s223, 128
        $region36: #{tpu_custom_call.1} parent=27 // pred_fallthru
          _
        %s232 = sand.u32 %s49, 1
        %s233 = scalar_lea.sflag [#allocation3], %s232
        %s234 = sand.u32 %s49, 1
        %s235 = smul.addr %s234, 8
        %s236 = scalar_lea.vmem [#allocation2], %s235
        %p237 = pneg %p62
        %p238 = pneg %p59
        %s239 = sand.u32 %s77, 1
        %s240 = scalar_lea.sflag [#allocation6], %s239
        %s241 = sand.u32 %s77, 1
        %s242 = smul.addr %s241, 8
        %s243 = scalar_lea.vmem [#allocation5], %s242
        %p244 = pneg %p90
        %p245 = pneg %p87
        %p246 = pneg %p116
        %p247 = pneg %p113
        %s248 = sand.u32 %s103, 1
        %s249 = scalar_lea.sflag [#allocation4], %s248
        %s250 = sand.u32 %s103, 1
        %s251 = smul.addr %s250, 2
        %s252 = scalar_lea.vmem [#allocation7], %s251
        %p253 = pneg %p142
        %p254 = pneg %p139
        %s255 = sand.u32 %s129, 1
        %s256 = scalar_lea.sflag [#allocation9], %s255
        %s257 = sand.u32 %s129, 1
        %s258 = smul.addr %s257, 2
        %s259 = scalar_lea.vmem [#allocation8], %s258
        %s260 = smul.u32 2, %s32
        %s261 = smul.u32 2, %s32
        %p262 = scmp.eq.s32.totalorder %s32, 0
        // Predicated region
        $region37: #{tpu_custom_call.1} parent=27 // pred_check
          %p263 = pneg %p262
        $region38: #{tpu_custom_call.1} parent=27 // pred_check_branch
          %265 = sbr.rel (%p263) target = $region40
        $region39: #{tpu_custom_call.1} parent=27 // pred_region
          %v266 = vlaneseq
          %vm267 = vcmp.ge.s32.totalorder %v266, 0
          %vm268 = vcmp.lt.s32.totalorder %v266, 256
          %vm269 = vmand %vm267, %vm268
          %270 = vst.msk [vmem:[%s252] sm:$0x3] %vm269, 0.0
          %271 = vst.msk [vmem:[%s259] sm:$0x3] %vm269, 0.0
        $region40: #{tpu_custom_call.1} parent=27 // pred_fallthru
          _
        %v272 = vld [vmem:[%s216] sm:$0xff]
        %v273 = vld [vmem:[%s226] sm:$0xff]
        %275 = vst [vmem:[#allocation1] ss:$2 sm:$0xff] %v272
        %v276 = vld.sshfl [vmem:[#allocation1] sm:$0xff pattern:$0x75316420]
        %v277 = vld.sshfl [vmem:[#allocation1 + $0x8] sm:$0xff pattern:$0x75316420]
        %vm280 = vcmask 1043456
        %v281 = vsel %vm280, %v276, -inf
        %v282 = vrot.slane %v281, 4
        %v283 = vmax.f32 %v281, %v282
        %v284 = vrot.slane %v283, 2
        %v285 = vmax.f32 %v283, %v284
        %v286 = vrot.slane %v285, 1
        %v287 = vmax.f32 %v285, %v286
        %v288 = vsel %vm280, %v277, -inf
        %v289 = vrot.slane %v288, 4
        %v290 = vmax.f32 %v288, %v289
        %v291 = vrot.slane %v290, 2
        %v292 = vmax.f32 %v290, %v291
        %v293 = vrot.slane %v292, 1
        %v294 = vmax.f32 %v292, %v293
        %v297 = vrot.slane %v294, 4
        %v298 = vsel %vm280, %v287, %v297
        %v300 = vsub.f32 %v272, %v298
        %v301 = vmul.f32 %v300, 1.442695
        %v302 = vpow.pop %v301
        %304 = vst [vmem:[#allocation1] ss:$2 sm:$0xff] %v302
        %v305 = vld.sshfl [vmem:[#allocation1] sm:$0xff pattern:$0x75316420]
        %v306 = vld.sshfl [vmem:[#allocation1 + $0x8] sm:$0xff pattern:$0x75316420]
        %v309 = vsel %vm280, %v305, 0.0
        %v310 = vrot.slane %v309, 4
        %v311 = vadd.f32 %v309, %v310
        %v312 = vrot.slane %v311, 2
        %v313 = vadd.f32 %v311, %v312
        %v314 = vrot.slane %v313, 1
        %v315 = vadd.f32 %v313, %v314
        %v316 = vsel %vm280, %v306, 0.0
        %v317 = vrot.slane %v316, 4
        %v318 = vadd.f32 %v316, %v317
        %v319 = vrot.slane %v318, 2
        %v320 = vadd.f32 %v318, %v319
        %v321 = vrot.slane %v320, 1
        %v322 = vadd.f32 %v320, %v321
        %v323 = vlog2.pop %v315
        %v324 = vmul.f32 %v323, 0.6931472
        %v325 = vlog2.pop %v322
        %v326 = vmul.f32 %v325, 0.6931472
        %v329 = vrot.slane %v326, 4
        %v330 = vsel %vm280, %v324, %v329
        %v332 = vsub.f32 %v300, %v330
        %vm333 = vcmp.ne.f32.partialorder %v273, -1.0
        %v334 = vsub.f32 0.0, %v332
        %v335 = vmul.f32 %v334, %v273
        %v336 = vsel %vm333, %v335, 0.0
        %v337 = vld [vmem:[%s252] sm:$0x3]
        %339 = vst [vmem:[#allocation1] ss:$2 sm:$0xff] %v336
        %v340 = vld.sshfl [vmem:[#allocation1] sm:$0xff pattern:$0x75316420]
        %v341 = vld.sshfl [vmem:[#allocation1 + $0x8] sm:$0xff pattern:$0x75316420]
        %v344 = vsel %vm280, %v340, 0.0
        %v345 = vrot.slane %v344, 4
        %v346 = vadd.f32 %v344, %v345
        %v347 = vrot.slane %v346, 2
        %v348 = vadd.f32 %v346, %v347
        %v349 = vrot.slane %v348, 1
        %v350 = vadd.f32 %v348, %v349
        %v351 = vsel %vm280, %v341, 0.0
        %v352 = vrot.slane %v351, 4
        %v353 = vadd.f32 %v351, %v352
        %v354 = vrot.slane %v353, 2
        %v355 = vadd.f32 %v353, %v354
        %v356 = vrot.slane %v355, 1
        %v357 = vadd.f32 %v355, %v356
        %v360 = vrot.slane %v357, 7
        %vm361 = vcmask 1040384
        %v362 = vsel %vm361, %v350, %v360
        %v364 = vadd.f32 %v337, %v362
        %v365 = vlaneseq
        %vm366 = vcmp.ge.s32.totalorder %v365, 0
        %vm367 = vcmp.lt.s32.totalorder %v365, 256
        %vm368 = vmand %vm366, %vm367
        %369 = vst.msk [vmem:[%s252] sm:$0x3] %vm368, %v364
        %v370 = vld [vmem:[%s259] sm:$0x3]
        %v371 = vsel %vm333, 1, 0
        %v372 = vcvt.s32.f32 %v371
        %374 = vst [vmem:[#allocation1] ss:$2 sm:$0xff] %v372
        %v375 = vld.sshfl [vmem:[#allocation1] sm:$0xff pattern:$0x75316420]
        %v376 = vld.sshfl [vmem:[#allocation1 + $0x8] sm:$0xff pattern:$0x75316420]
        %v379 = vsel %vm280, %v375, 0.0
        %v380 = vrot.slane %v379, 4
        %v381 = vadd.f32 %v379, %v380
        %v382 = vrot.slane %v381, 2
        %v383 = vadd.f32 %v381, %v382
        %v384 = vrot.slane %v383, 1
        %v385 = vadd.f32 %v383, %v384
        %v386 = vsel %vm280, %v376, 0.0
        %v387 = vrot.slane %v386, 4
        %v388 = vadd.f32 %v386, %v387
        %v389 = vrot.slane %v388, 2
        %v390 = vadd.f32 %v388, %v389
        %v391 = vrot.slane %v390, 1
        %v392 = vadd.f32 %v390, %v391
        %v395 = vrot.slane %v392, 7
        %v396 = vsel %vm361, %v385, %v395
        %v398 = vadd.f32 %v370, %v396
        %399 = vst.msk [vmem:[%s259] sm:$0x3] %vm368, %v398
        %s400 = sand.u32 %s103, 1
        %s401 = scalar_lea.sflag [#allocation4], %s400
        %s402 = sand.u32 %s103, 1
        %s403 = smul.addr %s402, 2
        %s404 = scalar_lea.vmem [#allocation7], %s403
        %s405 = sand.u32 %s129, 1
        %s406 = scalar_lea.sflag [#allocation9], %s405
        %s407 = sand.u32 %s129, 1
        %s408 = smul.addr %s407, 2
        %s409 = scalar_lea.vmem [#allocation8], %s408
        // Predicated region
        $region41: #{tpu_custom_call.1} parent=27 // pred_check
          %p410 = pneg %p113
        $region42: #{tpu_custom_call.1} parent=27 // pred_check_branch
          %412 = sbr.rel (%p410) target = $region44
        $region43: #{tpu_custom_call.1} parent=27 // pred_region
          %414 = vsyncadd %s401, 0
          %s415 = smul.addr %s31, 2
          %s416 = scalar_lea.hbm %s2, %s415
          %s418 = sshll.u32 %s404, 4
          %s419 = int_to_ptr.vmem [resolvable:$true] %s418
          %s420 = sshll.u32 %s416, 4
          %s421 = int_to_ptr.hbm [resolvable:$true] %s420
          %423 = dma.vmem_to_hbm [thread:$0]  %s419, 32, %s421, %s401
        $region44: #{tpu_custom_call.1} parent=27 // pred_fallthru
          _
        // Predicated region
        $region45: #{tpu_custom_call.1} parent=27 // pred_check
          %p424 = pneg %p139
        $region46: #{tpu_custom_call.1} parent=27 // pred_check_branch
          %426 = sbr.rel (%p424) target = $region48
        $region47: #{tpu_custom_call.1} parent=27 // pred_region
          %428 = vsyncadd %s406, 0
          %s429 = smul.addr %s31, 2
          %s430 = scalar_lea.hbm %s3, %s429
          %s432 = sshll.u32 %s409, 4
          %s433 = int_to_ptr.vmem [resolvable:$true] %s432
          %s434 = sshll.u32 %s430, 4
          %s435 = int_to_ptr.hbm [resolvable:$true] %s434
          %437 = dma.vmem_to_hbm [thread:$0]  %s433, 32, %s435, %s406
        $region48: #{tpu_custom_call.1} parent=27 // pred_fallthru
          _
      $region28: #{tpu_custom_call.1} parent=5 // pred_fallthru
        _
      %p438 = scmp.le.s32.totalorder 2, %s22
      // Predicated region
      $region49: #{tpu_custom_call.1} parent=5 // pred_check
        %p439 = pneg %p438
      $region50: #{tpu_custom_call.1} parent=5 // pred_check_branch
        %441 = sbr.rel (%p439) target = $region52
      $region51: #{tpu_custom_call.1} parent=5 // pred_region
        %s442 = ssub.s32 %s22, 2
        // Predicated region
        $region53: #{tpu_custom_call.1} parent=51 // pred_check
          %p443 = pneg %p119
        $region54: #{tpu_custom_call.1} parent=51 // pred_check_branch
          %445 = sbr.rel (%p443) target = $region56
        $region55: #{tpu_custom_call.1} parent=51 // pred_region
          %s446 = sand.u32 %s104, 1
          %s447 = scalar_lea.sflag [#allocation4], %s446
          %s448 = sand.u32 %s104, 1
          %s449 = smul.addr %s448, 2
          %s450 = scalar_lea.vmem [#allocation7], %s449
          %452 = dma.done %s447, 32
        $region56: #{tpu_custom_call.1} parent=51 // pred_fallthru
          _
        // Predicated region
        $region57: #{tpu_custom_call.1} parent=51 // pred_check
          %p453 = pneg %p145
        $region58: #{tpu_custom_call.1} parent=51 // pred_check_branch
          %455 = sbr.rel (%p453) target = $region60
        $region59: #{tpu_custom_call.1} parent=51 // pred_region
          %s456 = sand.u32 %s130, 1
          %s457 = scalar_lea.sflag [#allocation9], %s456
          %s458 = sand.u32 %s130, 1
          %s459 = smul.addr %s458, 2
          %s460 = scalar_lea.vmem [#allocation8], %s459
          %462 = dma.done %s457, 32
        $region60: #{tpu_custom_call.1} parent=51 // pred_fallthru
          _
      $region52: #{tpu_custom_call.1} parent=5 // pred_fallthru
        _
    $region6: #{tpu_custom_call.1} parent=1 // loop_footer
      %s26 = sadd.s32 1, %s22
    $region7: #{tpu_custom_call.1} parent=1 // loop_footer_branch
      %21 = sbr.rel target = $region3
    $region8: #{tpu_custom_call.1} parent=1 // loop_exit
      _
    %463 = vsyncpa [#allocation3], 1
    %s464 = scalar_lea.sflag [#allocation3], 1
    %465 = vsyncpa %s464, 1
    %466 = vsyncpa [#allocation6], 1
    %s467 = scalar_lea.sflag [#allocation6], 1
    %468 = vsyncpa %s467, 1
    %469 = vsyncpa [#allocation4], 1
    %s470 = scalar_lea.sflag [#allocation4], 1
    %471 = vsyncpa %s470, 1
    %472 = vsyncpa [#allocation9], 1
    %s473 = scalar_lea.sflag [#allocation9], 1
    %474 = vsyncpa %s473, 1

</llo_original>
